<compile_context>
chip_gen: v5e
topology: v5e:2x2
jax: 0.10.0
libtpu: 0.0.40
codegen_flags: <defaults>
</compile_context>

<pallas_src>
import functools

import numpy as np

import jax
import jax.numpy as jnp
from jax import lax
from jax.experimental import pallas as pl
from jax.experimental.pallas import tpu as pltpu


# --------------------------------------------------------------------------- #
# Pallas kernel: per-edge feature weights (norm2 over channels), padded output
# --------------------------------------------------------------------------- #
_VMEM_BUDGET = 32 << 20   # per-step working-set target (safe on v5e/v6e/v7x)
_VMEM_LIMIT = 44 << 20    # scoped VMEM limit handed to Mosaic


def _round_up(x, m):
    return ((x + m - 1) // m) * m


def _make_edge_weight_kernel(cc, bh, wp, has_halo, unroll):
    """Accumulate, for the current (batch, row-tile, channel-chunk) grid step,
    row-neighbour and col-neighbour squared distances into the resident
    (1, 2, bh, wp) f32 output block."""

    def kernel(*refs):
        if has_halo:
            fm_ref, halo_ref, out_ref = refs
        else:
            fm_ref, out_ref = refs
            halo_ref = None

        @pl.when(pl.program_id(2) == 0)
        def _init():
            out_ref[...] = jnp.zeros_like(out_ref)

        def body(ci, carry):
            fm_c = fm_ref[0, ci]                        # (bh, wp), input dtype
            # Lane roll in the raw dtype (halves XLU traffic for bf16), widen
            # once to f32, then sublane-roll the f32 copy.
            right = pltpu.roll(fm_c, wp - 1, axis=1)    # col w picks up col w+1
            f32 = fm_c.astype(jnp.float32)
            down = pltpu.roll(f32, bh - 1, axis=0)      # row r picks up row r+1
            dr = f32 - down
            dc = f32 - right.astype(jnp.float32)
            out_ref[0, 0] += dr * dr
            out_ref[0, 1] += dc * dc
            if has_halo:
                # The tile's last row wrapped onto its own first row above; swap
                # that contribution for the true next-tile neighbour (halo row 0).
                last = f32[bh - 1:bh, :]
                first = f32[0:1, :]
                nxt = halo_ref[0, ci, 0:1, :].astype(jnp.float32)
                out_ref[0, 0, bh - 1:bh, :] += (last - nxt) ** 2 - (last - first) ** 2
            return carry

        lax.fori_loop(0, cc, body, 0, unroll=unroll)

    return kernel


def _step_bytes(bh, cc, wp, itemsize):
    inp = 2 * cc * bh * wp * itemsize          # double-buffered input block
    halo = 2 * cc * 8 * wp * itemsize          # double-buffered halo block
    out = 2 * 2 * bh * wp * 4                  # double-buffered f32 output block
    tmp = 6 * bh * wp * 4 + 4 * cc * wp * 4    # in-kernel f32 temporaries
    return inp + halo + out + tmp


def _select_tiles(C, Hp, Wp, itemsize, batch):
    """Pick (channel chunk, row tile): keep the full channel stack if possible,
    shrink the row tile first, and only tile channels as a last resort."""
    cands = sorted({Hp, *[d for d in range(8, Hp, 8) if Hp % d == 0]}, reverse=True)
    fits = [bh for bh in cands if _step_bytes(bh, C, Wp, itemsize) <= _VMEM_BUDGET]
    if fits:
        bh = fits[0]
        if batch == 1 and bh == Hp and len(fits) > 1:
            bh = fits[1]          # v7x megacore: keep >= 2 parallel tiles if B == 1
        return C, bh
    # Full channel stack does not fit even at the smallest row tile: tile channels.
    bh = cands[-1]
    per_cc = 2 * bh * Wp * itemsize + 2 * 8 * Wp * itemsize + 4 * Wp * 4
    fixed = 2 * 2 * bh * Wp * 4 + 6 * bh * Wp * 4
    cc = max(1, min(C, (_VMEM_BUDGET - fixed) // per_cc))
    return int(cc), bh


def _edge_weights_pallas(guide, bh, cc):
    B, Cp, Hp, Wp = guide.shape
    nH = Hp // bh
    nC = Cp // cc
    has_halo = nH > 1
    kernel = _make_edge_weight_kernel(cc, bh, Wp, has_halo, unroll=(cc <= 32))

    in_specs = [pl.BlockSpec((1, cc, bh, Wp), lambda b, h, c: (b, c, h, 0))]
    operands = [guide]
    if has_halo:
        rblk = bh // 8
        hb_last = Hp // 8 - 1
        in_specs.append(pl.BlockSpec(
            (1, cc, 8, Wp),
            lambda b, h, c: (b, c, jnp.minimum((h + 1) * rblk, hb_last), 0)))
        operands.append(guide)

    return pl.pallas_call(
        kernel,
        out_shape=jax.ShapeDtypeStruct((B, 2, Hp, Wp), jnp.float32),
        grid=(B, nH, nC),
        in_specs=in_specs,
        out_specs=pl.BlockSpec((1, 2, bh, Wp), lambda b, h, c: (b, 0, h, 0)),
        compiler_params=pltpu.CompilerParams(
            dimension_semantics=("parallel", "parallel", "arbitrary"),
            vmem_limit_bytes=_VMEM_LIMIT),
    )(*operands)


def edge_weights(guide, row_block=None):
    """(B, C, H, W) -> (B, E) float32 with E = (H-1)*W + H*(W-1), norm2 distance."""
    B, C, H, W = guide.shape
    Hp = _round_up(H, 8)
    Wp = _round_up(W, 128)
    itemsize = jnp.dtype(guide.dtype).itemsize
    if row_block is None:
        cc, bh = _select_tiles(C, Hp, Wp, itemsize, B)
    else:
        bh = int(row_block)
        cc = C
        assert Hp % bh == 0 and (bh % 8 == 0 or bh == Hp), "invalid forced row block"
    Cp = _round_up(C, cc)
    if (Cp, Hp, Wp) != (C, H, W):
        # Zero padding is inert: pad channels diff to 0; pad rows/cols are dropped.
        guide = jnp.pad(guide, ((0, 0), (0, Cp - C), (0, Hp - H), (0, Wp - W)))

    packed = _edge_weights_pallas(guide, bh, cc)           # (B, 2, Hp, Wp) f32
    wr = packed[:, 0, : H - 1, :W].reshape(B, -1)
    wc = packed[:, 1, :H, : W - 1].reshape(B, -1)
    return jnp.concatenate([wr, wc], axis=1)


# --------------------------------------------------------------------------- #
# Grid-graph edge index (mirrors _build_matrix_index)
# --------------------------------------------------------------------------- #
def build_matrix_index(batch, height, width):
    row = jnp.arange(width, dtype=jnp.int32)[None, :]
    col = jnp.arange(height, dtype=jnp.int32)[:, None]
    raw_index = row + col * width                                     # (H, W)
    row_index = jnp.stack([raw_index[:-1, :], raw_index[1:, :]], 2)   # (H-1, W, 2)
    col_index = jnp.stack([raw_index[:, :-1], raw_index[:, 1:]], 2)   # (H, W-1, 2)
    index = jnp.concatenate(
        [row_index.reshape(1, -1, 2), col_index.reshape(1, -1, 2)], axis=1)
    return jnp.broadcast_to(index, (batch, index.shape[1], 2))


# --------------------------------------------------------------------------- #
# MST: vectorised edge-list Boruvka (replacement for the Boruvka CUDA `mst` op)
# --------------------------------------------------------------------------- #
def _boruvka_mst(weight, index, num_vertices):
    """weight: (E,) f32, index: (E, 2) int32 -> (V-1, 2) int32 MST edges.

    Ties are broken lexicographically by (weight, edge id), so the per-round
    selection is cycle-free; components hook + pointer-jump, O(E log V) fully
    vectorised work and an O(E) compaction of the selected edges.
    # TODO(synk): the CUDA Boruvka op may emit tree edges in a different order /
    # orientation; the tree edge SET is identical for distinct weights.
    """
    E = index.shape[0]
    V = num_vertices
    u = index[:, 0].astype(jnp.int32)
    v = index[:, 1].astype(jnp.int32)
    w = weight.astype(jnp.float32)
    eidx = jnp.arange(E, dtype=jnp.int32)

    src = jnp.concatenate([u, v])                  # directed edges, (2E,)
    dst = jnp.concatenate([v, u])
    w2 = jnp.concatenate([w, w])
    eid2 = jnp.concatenate([eidx, eidx])

    labels = jnp.arange(V, dtype=jnp.int32)
    num_rounds = max(1, (V - 1).bit_length())      # components at least halve/round

    def one_round(_, carry):
        comp, in_tree = carry
        cs, cd = comp[src], comp[dst]
        outgoing = cs != cd
        w_eff = jnp.where(outgoing, w2, jnp.inf)
        # per-component lexicographic min over (weight, undirected edge id)
        min_w = jax.ops.segment_min(w_eff, cs, num_segments=V)
        is_min = outgoing & (w_eff == min_w[cs])
        sel = jax.ops.segment_min(jnp.where(is_min, eid2, E), cs, num_segments=V)
        has_sel = sel < E

        in_tree = in_tree.at[jnp.where(has_sel, sel, E)].set(True)
        in_tree = in_tree.at[E].set(False)

        # hook each component onto the component across its selected edge
        sel_safe = jnp.where(has_sel, sel, 0)
        other = comp[u[sel_safe]] + comp[v[sel_safe]] - labels
        ptr = jnp.where(has_sel, other, labels)
        # only 2-cycles are possible (mutual selection of the same edge): root
        # them at the smaller label, then pointer-jump to each tree's root.
        ptr = jnp.where((ptr[ptr] == labels) & (labels < ptr), labels, ptr)
        ptr = lax.fori_loop(0, num_rounds, lambda _, p: p[p], ptr)
        return ptr[comp], in_tree

    comp0 = labels
    in_tree0 = jnp.zeros((E + 1,), dtype=bool)     # slot E catches "no selection"
    _, in_tree = lax.fori_loop(0, num_rounds, one_round, (comp0, in_tree0))

    # O(E) stable compaction of the V-1 selected edge ids (ascending id order),
    # replacing the previous full-E argsort.
    sel_mask = in_tree[:E]
    pos = jnp.cumsum(sel_mask.astype(jnp.int32)) - 1
    order = jnp.zeros((V - 1,), jnp.int32).at[
        jnp.where(sel_mask, pos, V - 1)].set(eidx, mode="drop")
    return index[order].astype(jnp.int32)


# --------------------------------------------------------------------------- #
# Module equivalent
# --------------------------------------------------------------------------- #
class MinimumSpanningTree:
    """distance_func = norm2 over channels (inside the Pallas kernel),
    mapping_func = None."""

    def __call__(self, guide_in):
        return self.forward(guide_in)

    @functools.partial(jax.jit, static_argnums=0)
    def forward(self, guide_in):
        B, C, H, W = guide_in.shape
        V = H * W
        index = build_matrix_index(B, H, W)                  # (B, E, 2) int32
        weight = edge_weights(guide_in)                      # (B, E) Pallas hot path
        # TODO(synk): fold the batch dim into the segment ids instead of vmap if
        # the Boruvka stage ever dominates end-to-end at large batch.
        tree = jax.vmap(lambda wb: _boruvka_mst(wb, index[0], V))(weight)
        return tree                                          # (B, V-1, 2) int32


# --------------------------------------------------------------------------- #
if __name__ == "__main__":
    key = jax.random.PRNGKey(0)
    k1, k2, k3 = jax.random.split(key, 3)

    B, C, H, W = 2, 4, 16, 16
    guide_in = jax.random.normal(k1, (B, C, H, W), dtype=jnp.float32)

    def ref_weights(g):
        g = g.astype(jnp.float32)
        wr = jnp.sum((g[:, :, :-1, :] - g[:, :, 1:, :]) ** 2, axis=1)
        wc = jnp.sum((g[:, :, :, :-1] - g[:, :, :, 1:]) ** 2, axis=1)
        b = g.shape[0]
        return jnp.concatenate([wr.reshape(b, -1), wc.reshape(b, -1)], axis=1)

    # 1) Pallas edge weights vs. plain-JAX reference (single row tile, no halo)
    w_pallas = jax.block_until_ready(edge_weights(guide_in))
    w_ref = ref_weights(guide_in)
    assert jnp.allclose(w_pallas, w_ref, atol=1e-4, rtol=1e-4), "edge weights mismatch"

    # 2) tiled-rows + halo path + W padding (forced bh=8, non-128 W, non-pow2 C)
    g2 = jax.random.normal(k2, (1, 3, 24, 20), dtype=jnp.float32)
    w2 = jax.block_until_ready(edge_weights(g2, row_block=8))
    assert jnp.allclose(w2, ref_weights(g2), atol=1e-4, rtol=1e-4), "halo path mismatch"

    # 3) bf16 guide (raw-dtype lane roll before cast, auto row split for B == 1)
    g3 = jax.random.normal(k3, (1, 5, 16, 16), dtype=jnp.bfloat16)
    w3 = jax.block_until_ready(edge_weights(g3))
    assert jnp.allclose(w3, ref_weights(g3), atol=1e-3, rtol=1e-3), "bf16 path mismatch"

    # --- full forward pass ---
    mst_module = MinimumSpanningTree()
    tree = jax.block_until_ready(mst_module(guide_in))
    V = H * W
    assert tree.shape == (B, V - 1, 2) and tree.dtype == jnp.int32

    # --- validate the Boruvka MST against a small numpy Prim reference ---
    idx_np = np.asarray(build_matrix_index(B, H, W)[0])
    w_np = np.asarray(w_ref)
    tree_np = np.asarray(tree)

    def prim_total(weights_e, idx_e, num_v):
        adj = np.full((num_v, num_v), np.inf, dtype=np.float64)
        adj[idx_e[:, 0], idx_e[:, 1]] = weights_e
        adj[idx_e[:, 1], idx_e[:, 0]] = weights_e
        dist = adj[0].copy()
        done = np.zeros(num_v, dtype=bool)
        done[0] = True
        total = 0.0
        for _ in range(num_v - 1):
            d = np.where(done, np.inf, dist)
            nxt = int(np.argmin(d))
            total += d[nxt]
            done[nxt] = True
            dist = np.minimum(dist, adj[nxt])
        return total

    for b in range(B):
        ew = {}
        for (p, q), wt in zip(idx_np.tolist(), w_np[b].tolist()):
            ew[(p, q)] = wt
            ew[(q, p)] = wt
        edges_b = [tuple(e) for e in tree_np[b].tolist()]
        assert len({frozenset(e) for e in edges_b}) == V - 1, "duplicate tree edges"
        total_b = sum(ew[e] for e in edges_b)          # KeyError => non-graph edge
        ref_total = prim_total(w_np[b], idx_np, V)
        assert abs(total_b - ref_total) <= 1e-3 * max(1.0, ref_total), "MST weight mismatch"

    print("KERNEL_OK")
</pallas_src>

<mosaic_0001>
module attributes {stable_mosaic.version = 11 : i64} {
  func.func @kernel(%arg0: i32, %arg1: i32, %arg2: i32, %arg3: memref<1x4x16x128xf32, #tpu.memory_space<vmem>>, %arg4: memref<1x2x16x128xf32, #tpu.memory_space<vmem>>) attributes {dimension_semantics = [#tpu.dimension_semantics<parallel>, #tpu.dimension_semantics<parallel>, #tpu.dimension_semantics<arbitrary>], iteration_bounds = array<i64: 2, 1, 1>, scalar_prefetch = 0 : i64, scratch_operands = 0 : i64, tpu.core_type = #tpu.core_type<tc>, window_params = [{transform_indices = @transform_0, window_bounds = array<i64: 1, 4, 16, 128>}, {transform_indices = @transform_1, window_bounds = array<i64: 1, 2, 16, 128>}]} {
    %c0_i32 = arith.constant 0 : i32
    %0 = arith.cmpi eq, %arg2, %c0_i32 : i32
    %1 = arith.extui %0 : i1 to i32
    %c0_i32_0 = arith.constant 0 : i32
    %2 = arith.cmpi ne, %1, %c0_i32_0 : i32
    scf.if %2 {
      %cst = arith.constant 0.000000e+00 : f32
      %87 = vector.broadcast %cst : f32 to vector<1x2x16x128xf32>
      %c0_82 = arith.constant 0 : index
      %c0_83 = arith.constant 0 : index
      %c0_84 = arith.constant 0 : index
      %c0_85 = arith.constant 0 : index
      %88 = vector.load %arg4[%c0_82, %c0_83, %c0_84, %c0_85] : memref<1x2x16x128xf32, #tpu.memory_space<vmem>>, vector<1x2x16x128xf32>
      tpu.vector_store %arg4[%c0_82, %c0_83, %c0_84, %c0_85], %87 {strides = array<i32>} : memref<1x2x16x128xf32, #tpu.memory_space<vmem>>, vector<1x2x16x128xf32>,
    } else {
    }
    %c0_i32_1 = arith.constant 0 : i32
    %c0 = arith.constant 0 : index
    %3 = arith.index_cast %c0_i32_1 : i32 to index
    %c0_2 = arith.constant 0 : index
    %c0_3 = arith.constant 0 : index
    %4 = vector.load %arg3[%c0, %3, %c0_2, %c0_3] : memref<1x4x16x128xf32, #tpu.memory_space<vmem>>, vector<1x1x16x128xf32>
    %5 = vector.shape_cast %4 : vector<1x1x16x128xf32> to vector<16x128xf32>
    %c127_i32 = arith.constant 127 : i32
    %6 = tpu.dynamic_rotate %5 by %c127_i32 dim 1 : vector<16x128xf32>, i32 -> vector<16x128xf32>
    %c15_i32 = arith.constant 15 : i32
    %7 = tpu.dynamic_rotate %5 by %c15_i32 dim 0 : vector<16x128xf32>, i32 -> vector<16x128xf32>
    %8 = arith.subf %5, %7 : vector<16x128xf32>
    %9 = arith.subf %5, %6 : vector<16x128xf32>
    %c0_4 = arith.constant 0 : index
    %c0_5 = arith.constant 0 : index
    %c0_6 = arith.constant 0 : index
    %c0_7 = arith.constant 0 : index
    %10 = vector.load %arg4[%c0_4, %c0_5, %c0_6, %c0_7] : memref<1x2x16x128xf32, #tpu.memory_space<vmem>>, vector<1x1x16x128xf32>
    %11 = vector.shape_cast %10 : vector<1x1x16x128xf32> to vector<16x128xf32>
    %12 = arith.mulf %8, %8 : vector<16x128xf32>
    %13 = arith.addf %11, %12 : vector<16x128xf32>
    %c0_8 = arith.constant 0 : index
    %c0_9 = arith.constant 0 : index
    %c0_10 = arith.constant 0 : index
    %c0_11 = arith.constant 0 : index
    %14 = vector.load %arg4[%c0_8, %c0_9, %c0_10, %c0_11] : memref<1x2x16x128xf32, #tpu.memory_space<vmem>>, vector<1x1x16x128xf32>
    %15 = vector.shape_cast %14 : vector<1x1x16x128xf32> to vector<16x128xf32>
    %16 = vector.shape_cast %13 : vector<16x128xf32> to vector<1x1x16x128xf32>
    tpu.vector_store %arg4[%c0_8, %c0_9, %c0_10, %c0_11], %16 {strides = array<i32>} : memref<1x2x16x128xf32, #tpu.memory_space<vmem>>, vector<1x1x16x128xf32>,
    %c0_12 = arith.constant 0 : index
    %c1 = arith.constant 1 : index
    %c0_13 = arith.constant 0 : index
    %c0_14 = arith.constant 0 : index
    %17 = vector.load %arg4[%c0_12, %c1, %c0_13, %c0_14] : memref<1x2x16x128xf32, #tpu.memory_space<vmem>>, vector<1x1x16x128xf32>
    %18 = vector.shape_cast %17 : vector<1x1x16x128xf32> to vector<16x128xf32>
    %19 = arith.mulf %9, %9 : vector<16x128xf32>
    %20 = arith.addf %18, %19 : vector<16x128xf32>
    %c0_15 = arith.constant 0 : index
    %c1_16 = arith.constant 1 : index
    %c0_17 = arith.constant 0 : index
    %c0_18 = arith.constant 0 : index
    %21 = vector.load %arg4[%c0_15, %c1_16, %c0_17, %c0_18] : memref<1x2x16x128xf32, #tpu.memory_space<vmem>>, vector<1x1x16x128xf32>
    %22 = vector.shape_cast %21 : vector<1x1x16x128xf32> to vector<16x128xf32>
    %23 = vector.shape_cast %20 : vector<16x128xf32> to vector<1x1x16x128xf32>
    tpu.vector_store %arg4[%c0_15, %c1_16, %c0_17, %c0_18], %23 {strides = array<i32>} : memref<1x2x16x128xf32, #tpu.memory_space<vmem>>, vector<1x1x16x128xf32>,
    %c1_i32 = arith.constant 1 : i32
    %c0_19 = arith.constant 0 : index
    %24 = arith.index_cast %c1_i32 : i32 to index
    %c0_20 = arith.constant 0 : index
    %c0_21 = arith.constant 0 : index
    %25 = vector.load %arg3[%c0_19, %24, %c0_20, %c0_21] : memref<1x4x16x128xf32, #tpu.memory_space<vmem>>, vector<1x1x16x128xf32>
    %26 = vector.shape_cast %25 : vector<1x1x16x128xf32> to vector<16x128xf32>
    %c127_i32_22 = arith.constant 127 : i32
    %27 = tpu.dynamic_rotate %26 by %c127_i32_22 dim 1 : vector<16x128xf32>, i32 -> vector<16x128xf32>
    %c15_i32_23 = arith.constant 15 : i32
    %28 = tpu.dynamic_rotate %26 by %c15_i32_23 dim 0 : vector<16x128xf32>, i32 -> vector<16x128xf32>
    %29 = arith.subf %26, %28 : vector<16x128xf32>
    %30 = arith.subf %26, %27 : vector<16x128xf32>
    %c0_24 = arith.constant 0 : index
    %c0_25 = arith.constant 0 : index
    %c0_26 = arith.constant 0 : index
    %c0_27 = arith.constant 0 : index
    %31 = vector.load %arg4[%c0_24, %c0_25, %c0_26, %c0_27] : memref<1x2x16x128xf32, #tpu.memory_space<vmem>>, vector<1x1x16x128xf32>
    %32 = vector.shape_cast %31 : vector<1x1x16x128xf32> to vector<16x128xf32>
    %33 = arith.mulf %29, %29 : vector<16x128xf32>
    %34 = arith.addf %32, %33 : vector<16x128xf32>
    %c0_28 = arith.constant 0 : index
    %c0_29 = arith.constant 0 : index
    %c0_30 = arith.constant 0 : index
    %c0_31 = arith.constant 0 : index
    %35 = vector.load %arg4[%c0_28, %c0_29, %c0_30, %c0_31] : memref<1x2x16x128xf32, #tpu.memory_space<vmem>>, vector<1x1x16x128xf32>
    %36 = vector.shape_cast %35 : vector<1x1x16x128xf32> to vector<16x128xf32>
    %37 = vector.shape_cast %34 : vector<16x128xf32> to vector<1x1x16x128xf32>
    tpu.vector_store %arg4[%c0_28, %c0_29, %c0_30, %c0_31], %37 {strides = array<i32>} : memref<1x2x16x128xf32, #tpu.memory_space<vmem>>, vector<1x1x16x128xf32>,
    %c0_32 = arith.constant 0 : index
    %c1_33 = arith.constant 1 : index
    %c0_34 = arith.constant 0 : index
    %c0_35 = arith.constant 0 : index
    %38 = vector.load %arg4[%c0_32, %c1_33, %c0_34, %c0_35] : memref<1x2x16x128xf32, #tpu.memory_space<vmem>>, vector<1x1x16x128xf32>
    %39 = vector.shape_cast %38 : vector<1x1x16x128xf32> to vector<16x128xf32>
    %40 = arith.mulf %30, %30 : vector<16x128xf32>
    %41 = arith.addf %39, %40 : vector<16x128xf32>
    %c0_36 = arith.constant 0 : index
    %c1_37 = arith.constant 1 : index
    %c0_38 = arith.constant 0 : index
    %c0_39 = arith.constant 0 : index
    %42 = vector.load %arg4[%c0_36, %c1_37, %c0_38, %c0_39] : memref<1x2x16x128xf32, #tpu.memory_space<vmem>>, vector<1x1x16x128xf32>
    %43 = vector.shape_cast %42 : vector<1x1x16x128xf32> to vector<16x128xf32>
    %44 = vector.shape_cast %41 : vector<16x128xf32> to vector<1x1x16x128xf32>
    tpu.vector_store %arg4[%c0_36, %c1_37, %c0_38, %c0_39], %44 {strides = array<i32>} : memref<1x2x16x128xf32, #tpu.memory_space<vmem>>, vector<1x1x16x128xf32>,
    %c2_i32 = arith.constant 2 : i32
    %c0_40 = arith.constant 0 : index
    %45 = arith.index_cast %c2_i32 : i32 to index
    %c0_41 = arith.constant 0 : index
    %c0_42 = arith.constant 0 : index
    %46 = vector.load %arg3[%c0_40, %45, %c0_41, %c0_42] : memref<1x4x16x128xf32, #tpu.memory_space<vmem>>, vector<1x1x16x128xf32>
    %47 = vector.shape_cast %46 : vector<1x1x16x128xf32> to vector<16x128xf32>
    %c127_i32_43 = arith.constant 127 : i32
    %48 = tpu.dynamic_rotate %47 by %c127_i32_43 dim 1 : vector<16x128xf32>, i32 -> vector<16x128xf32>
    %c15_i32_44 = arith.constant 15 : i32
    %49 = tpu.dynamic_rotate %47 by %c15_i32_44 dim 0 : vector<16x128xf32>, i32 -> vector<16x128xf32>
    %50 = arith.subf %47, %49 : vector<16x128xf32>
    %51 = arith.subf %47, %48 : vector<16x128xf32>
    %c0_45 = arith.constant 0 : index
    %c0_46 = arith.constant 0 : index
    %c0_47 = arith.constant 0 : index
    %c0_48 = arith.constant 0 : index
    %52 = vector.load %arg4[%c0_45, %c0_46, %c0_47, %c0_48] : memref<1x2x16x128xf32, #tpu.memory_space<vmem>>, vector<1x1x16x128xf32>
    %53 = vector.shape_cast %52 : vector<1x1x16x128xf32> to vector<16x128xf32>
    %54 = arith.mulf %50, %50 : vector<16x128xf32>
    %55 = arith.addf %53, %54 : vector<16x128xf32>
    %c0_49 = arith.constant 0 : index
    %c0_50 = arith.constant 0 : index
    %c0_51 = arith.constant 0 : index
    %c0_52 = arith.constant 0 : index
    %56 = vector.load %arg4[%c0_49, %c0_50, %c0_51, %c0_52] : memref<1x2x16x128xf32, #tpu.memory_space<vmem>>, vector<1x1x16x128xf32>
    %57 = vector.shape_cast %56 : vector<1x1x16x128xf32> to vector<16x128xf32>
    %58 = vector.shape_cast %55 : vector<16x128xf32> to vector<1x1x16x128xf32>
    tpu.vector_store %arg4[%c0_49, %c0_50, %c0_51, %c0_52], %58 {strides = array<i32>} : memref<1x2x16x128xf32, #tpu.memory_space<vmem>>, vector<1x1x16x128xf32>,
    %c0_53 = arith.constant 0 : index
    %c1_54 = arith.constant 1 : index
    %c0_55 = arith.constant 0 : index
    %c0_56 = arith.constant 0 : index
    %59 = vector.load %arg4[%c0_53, %c1_54, %c0_55, %c0_56] : memref<1x2x16x128xf32, #tpu.memory_space<vmem>>, vector<1x1x16x128xf32>
    %60 = vector.shape_cast %59 : vector<1x1x16x128xf32> to vector<16x128xf32>
    %61 = arith.mulf %51, %51 : vector<16x128xf32>
    %62 = arith.addf %60, %61 : vector<16x128xf32>
    %c0_57 = arith.constant 0 : index
    %c1_58 = arith.constant 1 : index
    %c0_59 = arith.constant 0 : index
    %c0_60 = arith.constant 0 : index
    %63 = vector.load %arg4[%c0_57, %c1_58, %c0_59, %c0_60] : memref<1x2x16x128xf32, #tpu.memory_space<vmem>>, vector<1x1x16x128xf32>
    %64 = vector.shape_cast %63 : vector<1x1x16x128xf32> to vector<16x128xf32>
    %65 = vector.shape_cast %62 : vector<16x128xf32> to vector<1x1x16x128xf32>
    tpu.vector_store %arg4[%c0_57, %c1_58, %c0_59, %c0_60], %65 {strides = array<i32>} : memref<1x2x16x128xf32, #tpu.memory_space<vmem>>, vector<1x1x16x128xf32>,
    %c3_i32 = arith.constant 3 : i32
    %c0_61 = arith.constant 0 : index
    %66 = arith.index_cast %c3_i32 : i32 to index
    %c0_62 = arith.constant 0 : index
    %c0_63 = arith.constant 0 : index
    %67 = vector.load %arg3[%c0_61, %66, %c0_62, %c0_63] : memref<1x4x16x128xf32, #tpu.memory_space<vmem>>, vector<1x1x16x128xf32>
    %68 = vector.shape_cast %67 : vector<1x1x16x128xf32> to vector<16x128xf32>
    %c127_i32_64 = arith.constant 127 : i32
    %69 = tpu.dynamic_rotate %68 by %c127_i32_64 dim 1 : vector<16x128xf32>, i32 -> vector<16x128xf32>
    %c15_i32_65 = arith.constant 15 : i32
    %70 = tpu.dynamic_rotate %68 by %c15_i32_65 dim 0 : vector<16x128xf32>, i32 -> vector<16x128xf32>
    %71 = arith.subf %68, %70 : vector<16x128xf32>
    %72 = arith.subf %68, %69 : vector<16x128xf32>
    %c0_66 = arith.constant 0 : index
    %c0_67 = arith.constant 0 : index
    %c0_68 = arith.constant 0 : index
    %c0_69 = arith.constant 0 : index
    %73 = vector.load %arg4[%c0_66, %c0_67, %c0_68, %c0_69] : memref<1x2x16x128xf32, #tpu.memory_space<vmem>>, vector<1x1x16x128xf32>
    %74 = vector.shape_cast %73 : vector<1x1x16x128xf32> to vector<16x128xf32>
    %75 = arith.mulf %71, %71 : vector<16x128xf32>
    %76 = arith.addf %74, %75 : vector<16x128xf32>
    %c0_70 = arith.constant 0 : index
    %c0_71 = arith.constant 0 : index
    %c0_72 = arith.constant 0 : index
    %c0_73 = arith.constant 0 : index
    %77 = vector.load %arg4[%c0_70, %c0_71, %c0_72, %c0_73] : memref<1x2x16x128xf32, #tpu.memory_space<vmem>>, vector<1x1x16x128xf32>
    %78 = vector.shape_cast %77 : vector<1x1x16x128xf32> to vector<16x128xf32>
    %79 = vector.shape_cast %76 : vector<16x128xf32> to vector<1x1x16x128xf32>
    tpu.vector_store %arg4[%c0_70, %c0_71, %c0_72, %c0_73], %79 {strides = array<i32>} : memref<1x2x16x128xf32, #tpu.memory_space<vmem>>, vector<1x1x16x128xf32>,
    %c0_74 = arith.constant 0 : index
    %c1_75 = arith.constant 1 : index
    %c0_76 = arith.constant 0 : index
    %c0_77 = arith.constant 0 : index
    %80 = vector.load %arg4[%c0_74, %c1_75, %c0_76, %c0_77] : memref<1x2x16x128xf32, #tpu.memory_space<vmem>>, vector<1x1x16x128xf32>
    %81 = vector.shape_cast %80 : vector<1x1x16x128xf32> to vector<16x128xf32>
    %82 = arith.mulf %72, %72 : vector<16x128xf32>
    %83 = arith.addf %81, %82 : vector<16x128xf32>
    %c0_78 = arith.constant 0 : index
    %c1_79 = arith.constant 1 : index
    %c0_80 = arith.constant 0 : index
    %c0_81 = arith.constant 0 : index
    %84 = vector.load %arg4[%c0_78, %c1_79, %c0_80, %c0_81] : memref<1x2x16x128xf32, #tpu.memory_space<vmem>>, vector<1x1x16x128xf32>
    %85 = vector.shape_cast %84 : vector<1x1x16x128xf32> to vector<16x128xf32>
    %86 = vector.shape_cast %83 : vector<16x128xf32> to vector<1x1x16x128xf32>
    tpu.vector_store %arg4[%c0_78, %c1_79, %c0_80, %c0_81], %86 {strides = array<i32>} : memref<1x2x16x128xf32, #tpu.memory_space<vmem>>, vector<1x1x16x128xf32>,
    %c4_i32 = arith.constant 4 : i32
    return
  }
  func.func @transform_0(%arg0: i32, %arg1: i32, %arg2: i32) -> (i32, i32, i32, i32) {
    %c0_i32 = arith.constant 0 : i32
    %c0_i32_0 = arith.constant 0 : i32
    return %arg0, %arg2, %arg1, %c0_i32 : i32, i32, i32, i32
  }
  func.func @transform_1(%arg0: i32, %arg1: i32, %arg2: i32) -> (i32, i32, i32, i32) {
    %c0_i32 = arith.constant 0 : i32
    %c0_i32_0 = arith.constant 0 : i32
    %c0_i32_1 = arith.constant 0 : i32
    return %arg0, %c0_i32, %arg1, %c0_i32_0 : i32, i32, i32, i32
  }
}

</mosaic_0001>

<llo_original>
// kernel: tpu_custom_call.1
$region0: #{tpu_custom_call.1}
  #allocation0 [shape = 'u32[]', space=smem, size = 0x4, offset = 0x4, fixed_abs, tag = 'smem constant byte address 0x4 - core index']
  #allocation1 [shape = 'u32[72,128]{1,0:T(1,128)}', space=vmem, size = 0x9000, scoped, tag = 'internal scratch']
  %s0 = inlined_call_operand.hbm [shape: f32[2,4,16,128], index: 0, kind: input, shape index: {}]
  %s1 = inlined_call_operand.hbm [shape: f32[2,2,16,128], index: 1, kind: output, shape index: {}]
  %s2 = sld [smem:[#allocation0]]
  $region45: #{tpu_custom_call.1} parent=0
    _
  %s4 = ssub.s32 1, %s2
  %s5 = scalar_select 0, %s4, %s2
  $region1: #{tpu_custom_call.1} parent=0
    #allocation2 [shape = 'u8[65536]{0}', space=vmem, size = 0x10000, scoped, tag = 'input window, operand 0']
    #allocation3 [shape = 's32[2]{0}', space=sflag, size = 0x8, scoped, tag = 'scoped memory for tpu_custom_call.1']
    #allocation4 [shape = 's32[2]{0}', space=sflag, size = 0x8, scoped, tag = 'scoped memory for tpu_custom_call.1']
    #allocation5 [shape = 'u8[32768]{0}', space=vmem, size = 0x8000, scoped, tag = 'output window, operand 0']
    %6 = vsyncpa [#allocation3], 0
    %s7 = scalar_lea.sflag [#allocation3], 1
    %8 = vsyncpa %s7, 0
    %9 = vsyncpa [#allocation4], 0
    %s10 = scalar_lea.sflag [#allocation4], 1
    %11 = vsyncpa %s10, 0
    loop: start=0, step=1, limit=4
    $region2: #{tpu_custom_call.1} parent=1 // loop_pre_header
      _
    $region3: #{tpu_custom_call.1} parent=1 // loop_header
      %s13 = sphi 0, %s17
      %p14 = scmp.ge.s32.totalorder %s13, 4
      %s20 = sphi 0, %s39
      %s21 = sphi 0, %s35
      %s22 = sphi 0, %s31
      %s23 = sphi 0, %s20
      %s24 = sphi 0, %s21
      %s25 = sphi 0, %s22
      %s26 = sphi 0, %s23
      %s27 = sphi 0, %s24
      %s28 = sphi 0, %s25
      %s46 = sphi 0, %s48
      %s49 = sphi 0, %s46
      %s50 = sphi 0, %s49
      %s66 = sphi 0, %s50
      %s74 = sphi 0, %s76
      %s77 = sphi 0, %s74
      %s78 = sphi 0, %s77
      %s94 = sphi 0, %s78
    $region4: #{tpu_custom_call.1} parent=1 // loop_header_branch
      %16 = sbr.rel (%p14) target = $region8
    $region5: #{tpu_custom_call.1} parent=1 // loop_body
      %s18 = ssub.s32 %s13, 1
      %s19 = ssub.s32 %s13, 2
      %s29 = sadd.s32 1, %s22
      %p30 = scmp.ge.s32.totalorder %s29, 1
      %s31 = scalar_select %p30, 0, %s29
      %s32 = sadd.s32 1, %s21
      %s33 = scalar_select %p30, %s32, %s21
      %p34 = scmp.ge.s32.totalorder %s33, 1
      %s35 = scalar_select %p34, 0, %s33
      %s36 = sadd.s32 1, %s20
      %s37 = scalar_select %p34, %s36, %s20
      %p38 = scmp.ge.s32.totalorder %s37, 2
      %s39 = scalar_select %p38, 0, %s37
      %s40 = ssub.s32 %s20, %s39
      %s41 = ssub.s32 %s22, %s31
      %s42 = sor.u32 %s40, %s41
      %s43 = ssub.s32 %s21, %s35
      %s44 = sor.u32 %s42, %s43
      %p45 = scmp.eq.s32.totalorder %s44, 0
      %s47 = sadd.s32 %s46, 1
      %s48 = scalar_select %p45, %s46, %s47
      %p51 = pneg %p45
      %p52 = scmp.eq.s32.totalorder %s13, 1
      %p53 = por %p51, %p52
      %p54 = scmp.ne.s32.totalorder %s46, %s49
      %p55 = scmp.eq.s32.totalorder %s13, 0
      %p56 = por %p54, %p55
      %p57 = scmp.ne.s32.totalorder %s46, %s49
      %p58 = scmp.eq.s32.totalorder %s18, 1
      %p59 = por %p57, %p58
      %p60 = scmp.ne.s32.totalorder %s49, %s50
      %p61 = scmp.eq.s32.totalorder %s18, 0
      %p62 = por %p60, %p61
      %p63 = scmp.ne.s32.totalorder %s49, %s50
      %p64 = scmp.eq.s32.totalorder %s19, 1
      %p65 = por %p63, %p64
      %p67 = scmp.ne.s32.totalorder %s50, %s66
      %p68 = scmp.eq.s32.totalorder %s19, 0
      %p69 = por %p67, %p68
      %s70 = ssub.s32 %s20, %s39
      %s71 = ssub.s32 %s21, %s35
      %s72 = sor.u32 %s70, %s71
      %p73 = scmp.eq.s32.totalorder %s72, 0
      %s75 = sadd.s32 %s74, 1
      %s76 = scalar_select %p73, %s74, %s75
      %p79 = pneg %p73
      %p80 = scmp.eq.s32.totalorder %s13, 1
      %p81 = por %p79, %p80
      %p82 = scmp.ne.s32.totalorder %s74, %s77
      %p83 = scmp.eq.s32.totalorder %s13, 0
      %p84 = por %p82, %p83
      %p85 = scmp.ne.s32.totalorder %s74, %s77
      %p86 = scmp.eq.s32.totalorder %s18, 1
      %p87 = por %p85, %p86
      %p88 = scmp.ne.s32.totalorder %s77, %s78
      %p89 = scmp.eq.s32.totalorder %s18, 0
      %p90 = por %p88, %p89
      %p91 = scmp.ne.s32.totalorder %s77, %s78
      %p92 = scmp.eq.s32.totalorder %s19, 1
      %p93 = por %p91, %p92
      %p95 = scmp.ne.s32.totalorder %s78, %s94
      %p96 = scmp.eq.s32.totalorder %s19, 0
      %p97 = por %p95, %p96
      %p98 = scmp.le.s32.totalorder 1, %s13
      %p99 = scmp.lt.s32.totalorder %s13, 3
      %p100 = pnand %p98, %p99
      %p101 = pneg %p100
      // Predicated region
      $region9: #{tpu_custom_call.1} parent=5 // pred_check
        _
      $region10: #{tpu_custom_call.1} parent=5 // pred_check_branch
        %103 = sbr.rel (%p100) target = $region12
      $region11: #{tpu_custom_call.1} parent=5 // pred_region
        %s104 = ssub.s32 %s13, 1
      $region12: #{tpu_custom_call.1} parent=5 // pred_fallthru
        _
      %p105 = scmp.lt.s32.totalorder %s13, 2
      // Predicated region
      $region13: #{tpu_custom_call.1} parent=5 // pred_check
        %p106 = pneg %p105
      $region14: #{tpu_custom_call.1} parent=5 // pred_check_branch
        %108 = sbr.rel (%p106) target = $region16
      $region15: #{tpu_custom_call.1} parent=5 // pred_region
        // Predicated region
        $region17: #{tpu_custom_call.1} parent=15 // pred_check
          %p109 = pneg %p56
        $region18: #{tpu_custom_call.1} parent=15 // pred_check_branch
          %111 = sbr.rel (%p109) target = $region20
        $region19: #{tpu_custom_call.1} parent=15 // pred_region
          %s112 = sand.u32 %s46, 1
          %s113 = scalar_lea.sflag [#allocation3], %s112
          %s114 = sand.u32 %s46, 1
          %s115 = smul.addr %s114, 64
          %s116 = scalar_lea.vmem [#allocation2], %s115
          %s117 = smul.u32 4, %s22
          %s118 = smul.u32 2, %s21
          %120 = vsyncadd %s113, 0
          %s121 = smul.addr %s117, 2
          %s122 = sadd.s32 %s118, %s121
          %s123 = smul.addr %s20, 8
          %s124 = sadd.s32 %s122, %s123
          %s125 = smul.addr %s124, 8
          %s126 = scalar_lea.hbm %s0, %s125
          %s127 = sshll.u32 %s126, 4
          %s128 = int_to_ptr.hbm [resolvable:$true] %s127
          %s129 = sshll.u32 %s116, 4
          %s130 = int_to_ptr.vmem [resolvable:$true] %s129
          %135 = dma.hbm_to_vmem [thread:$0]  %s128, 1024, %s130, %s113, 128, 128, 8
        $region20: #{tpu_custom_call.1} parent=15 // pred_fallthru
          _
      $region16: #{tpu_custom_call.1} parent=5 // pred_fallthru
        _
      %p136 = scmp.le.s32.totalorder 1, %s13
      %p137 = scmp.lt.s32.totalorder %s13, 3
      %p138 = pnand %p136, %p137
      %p139 = pneg %p138
      // Predicated region
      $region21: #{tpu_custom_call.1} parent=5 // pred_check
        _
      $region22: #{tpu_custom_call.1} parent=5 // pred_check_branch
        %141 = sbr.rel (%p138) target = $region24
      $region23: #{tpu_custom_call.1} parent=5 // pred_region
        %s142 = ssub.s32 %s13, 1
        %s143 = sand.u32 %s49, 1
        %s144 = scalar_lea.sflag [#allocation3], %s143
        %s145 = sand.u32 %s49, 1
        %s146 = smul.addr %s145, 64
        %s147 = scalar_lea.vmem [#allocation2], %s146
        // Predicated region
        $region25: #{tpu_custom_call.1} parent=23 // pred_check
          %p148 = pneg %p62
        $region26: #{tpu_custom_call.1} parent=23 // pred_check_branch
          %150 = sbr.rel (%p148) target = $region28
        $region27: #{tpu_custom_call.1} parent=23 // pred_region
          %152 = dma.done %s144, 1024
        $region28: #{tpu_custom_call.1} parent=23 // pred_fallthru
          _
        %s153 = sand.u32 %s49, 1
        %s154 = scalar_lea.sflag [#allocation3], %s153
        %s155 = sand.u32 %s49, 1
        %s156 = smul.addr %s155, 64
        %s157 = scalar_lea.vmem [#allocation2], %s156
        %p158 = pneg %p62
        %p159 = pneg %p59
        %p160 = pneg %p90
        %p161 = pneg %p87
        %s162 = sand.u32 %s77, 1
        %s163 = scalar_lea.sflag [#allocation4], %s162
        %s164 = sand.u32 %s77, 1
        %s165 = smul.addr %s164, 32
        %s166 = scalar_lea.vmem [#allocation5], %s165
        %s167 = smul.u32 4, %s25
        %s168 = smul.u32 2, %s24
        %s169 = smul.u32 2, %s24
        %p170 = scmp.eq.s32.totalorder %s25, 0
        // Predicated region
        $region29: #{tpu_custom_call.1} parent=23 // pred_check
          %p171 = pneg %p170
        $region30: #{tpu_custom_call.1} parent=23 // pred_check_branch
          %173 = sbr.rel (%p171) target = $region32
        $region31: #{tpu_custom_call.1} parent=23 // pred_region
          %174 = vst [vmem:[%s166] sm:$0xff] 0.0
          %175 = vst [vmem:[%s166 + $0x8] sm:$0xff] 0.0
          %176 = vst [vmem:[%s166 + $0x10] sm:$0xff] 0.0
          %177 = vst [vmem:[%s166 + $0x18] sm:$0xff] 0.0
        $region32: #{tpu_custom_call.1} parent=23 // pred_fallthru
          _
        %v178 = vld [vmem:[%s147] sm:$0xff]
        %v179 = vld [vmem:[%s147 + $0x8] sm:$0xff]
        %180 = vrot.lane.b32.xlu0 %v178, 127
        %v181 = vpop.permute.xlu0 %180
        %182 = vrot.lane.b32.xlu0 %v179, 127
        %v183 = vpop.permute.xlu0 %182
        %v184 = vrot.slane %v178, 1
        %v185 = vrot.slane %v179, 1
        %v186 = vlaneseq
        %v187 = vshrl.u32 %v186, 7
        %vm188 = vcmp.lt.s32.totalorder %v187, 7
        %v189 = vsel %vm188, %v184, %v185
        %v190 = vsel %vm188, %v185, %v184
        %v191 = vsub.f32 %v178, %v189
        %v192 = vsub.f32 %v179, %v190
        %v193 = vsub.f32 %v178, %v181
        %v194 = vsub.f32 %v179, %v183
        %v195 = vld [vmem:[%s166] sm:$0xff]
        %v196 = vld [vmem:[%s166 + $0x8] sm:$0xff]
        %v197 = vmul.f32 %v191, %v191
        %v198 = vmul.f32 %v192, %v192
        %v199 = vadd.f32 %v195, %v197
        %v200 = vadd.f32 %v196, %v198
        %201 = vst [vmem:[%s166] sm:$0xff] %v199
        %202 = vst [vmem:[%s166 + $0x8] sm:$0xff] %v200
        %s203 = scalar_lea.vmem %s166, 16 [#allocation5]
        %v204 = vld [vmem:[%s203] sm:$0xff]
        %v205 = vld [vmem:[%s203 + $0x8] sm:$0xff]
        %v206 = vmul.f32 %v193, %v193
        %v207 = vmul.f32 %v194, %v194
        %v208 = vadd.f32 %v204, %v206
        %v209 = vadd.f32 %v205, %v207
        %210 = vst [vmem:[%s203] sm:$0xff] %v208
        %211 = vst [vmem:[%s203 + $0x8] sm:$0xff] %v209
        %s212 = scalar_lea.vmem %s147, 16 [#allocation2]
        %v213 = vld [vmem:[%s212] sm:$0xff]
        %v214 = vld [vmem:[%s212 + $0x8] sm:$0xff]
        %215 = vrot.lane.b32.xlu0 %v213, 127
        %v216 = vpop.permute.xlu0 %215
        %217 = vrot.lane.b32.xlu0 %v214, 127
        %v218 = vpop.permute.xlu0 %217
        %v219 = vrot.slane %v213, 1
        %v220 = vrot.slane %v214, 1
        %v221 = vsel %vm188, %v219, %v220
        %v222 = vsel %vm188, %v220, %v219
        %v223 = vsub.f32 %v213, %v221
        %v224 = vsub.f32 %v214, %v222
        %v225 = vsub.f32 %v213, %v216
        %v226 = vsub.f32 %v214, %v218
        %v227 = vld [vmem:[%s166] sm:$0xff]
        %v228 = vld [vmem:[%s166 + $0x8] sm:$0xff]
        %v229 = vmul.f32 %v223, %v223
        %v230 = vmul.f32 %v224, %v224
        %v231 = vadd.f32 %v227, %v229
        %v232 = vadd.f32 %v228, %v230
        %233 = vst [vmem:[%s166] sm:$0xff] %v231
        %234 = vst [vmem:[%s166 + $0x8] sm:$0xff] %v232
        %v235 = vld [vmem:[%s203] sm:$0xff]
        %v236 = vld [vmem:[%s203 + $0x8] sm:$0xff]
        %v237 = vmul.f32 %v225, %v225
        %v238 = vmul.f32 %v226, %v226
        %v239 = vadd.f32 %v235, %v237
        %v240 = vadd.f32 %v236, %v238
        %241 = vst [vmem:[%s203] sm:$0xff] %v239
        %242 = vst [vmem:[%s203 + $0x8] sm:$0xff] %v240
        %s243 = scalar_lea.vmem %s147, 32 [#allocation2]
        %v244 = vld [vmem:[%s243] sm:$0xff]
        %v245 = vld [vmem:[%s243 + $0x8] sm:$0xff]
        %246 = vrot.lane.b32.xlu0 %v244, 127
        %v247 = vpop.permute.xlu0 %246
        %248 = vrot.lane.b32.xlu0 %v245, 127
        %v249 = vpop.permute.xlu0 %248
        %v250 = vrot.slane %v244, 1
        %v251 = vrot.slane %v245, 1
        %v252 = vsel %vm188, %v250, %v251
        %v253 = vsel %vm188, %v251, %v250
        %v254 = vsub.f32 %v244, %v252
        %v255 = vsub.f32 %v245, %v253
        %v256 = vsub.f32 %v244, %v247
        %v257 = vsub.f32 %v245, %v249
        %v258 = vld [vmem:[%s166] sm:$0xff]
        %v259 = vld [vmem:[%s166 + $0x8] sm:$0xff]
        %v260 = vmul.f32 %v254, %v254
        %v261 = vmul.f32 %v255, %v255
        %v262 = vadd.f32 %v258, %v260
        %v263 = vadd.f32 %v259, %v261
        %264 = vst [vmem:[%s166] sm:$0xff] %v262
        %265 = vst [vmem:[%s166 + $0x8] sm:$0xff] %v263
        %v266 = vld [vmem:[%s203] sm:$0xff]
        %v267 = vld [vmem:[%s203 + $0x8] sm:$0xff]
        %v268 = vmul.f32 %v256, %v256
        %v269 = vmul.f32 %v257, %v257
        %v270 = vadd.f32 %v266, %v268
        %v271 = vadd.f32 %v267, %v269
        %272 = vst [vmem:[%s203] sm:$0xff] %v270
        %273 = vst [vmem:[%s203 + $0x8] sm:$0xff] %v271
        %s274 = scalar_lea.vmem %s147, 48 [#allocation2]
        %v275 = vld [vmem:[%s274] sm:$0xff]
        %v276 = vld [vmem:[%s274 + $0x8] sm:$0xff]
        %277 = vrot.lane.b32.xlu0 %v275, 127
        %v278 = vpop.permute.xlu0 %277
        %279 = vrot.lane.b32.xlu0 %v276, 127
        %v280 = vpop.permute.xlu0 %279
        %v281 = vrot.slane %v275, 1
        %v282 = vrot.slane %v276, 1
        %v283 = vsel %vm188, %v281, %v282
        %v284 = vsel %vm188, %v282, %v281
        %v285 = vsub.f32 %v275, %v283
        %v286 = vsub.f32 %v276, %v284
        %v287 = vsub.f32 %v275, %v278
        %v288 = vsub.f32 %v276, %v280
        %v289 = vld [vmem:[%s166] sm:$0xff]
        %v290 = vld [vmem:[%s166 + $0x8] sm:$0xff]
        %v291 = vmul.f32 %v285, %v285
        %v292 = vmul.f32 %v286, %v286
        %v293 = vadd.f32 %v289, %v291
        %v294 = vadd.f32 %v290, %v292
        %295 = vst [vmem:[%s166] sm:$0xff] %v293
        %296 = vst [vmem:[%s166 + $0x8] sm:$0xff] %v294
        %v297 = vld [vmem:[%s203] sm:$0xff]
        %v298 = vld [vmem:[%s203 + $0x8] sm:$0xff]
        %v299 = vmul.f32 %v287, %v287
        %v300 = vmul.f32 %v288, %v288
        %v301 = vadd.f32 %v297, %v299
        %v302 = vadd.f32 %v298, %v300
        %303 = vst [vmem:[%s203] sm:$0xff] %v301
        %304 = vst [vmem:[%s203 + $0x8] sm:$0xff] %v302
        %s305 = sand.u32 %s77, 1
        %s306 = scalar_lea.sflag [#allocation4], %s305
        %s307 = sand.u32 %s77, 1
        %s308 = smul.addr %s307, 32
        %s309 = scalar_lea.vmem [#allocation5], %s308
        // Predicated region
        $region33: #{tpu_custom_call.1} parent=23 // pred_check
          %p310 = pneg %p87
        $region34: #{tpu_custom_call.1} parent=23 // pred_check_branch
          %312 = sbr.rel (%p310) target = $region36
        $region35: #{tpu_custom_call.1} parent=23 // pred_region
          %s313 = smul.u32 2, %s24
          %315 = vsyncadd %s306, 0
          %s316 = smul.addr %s23, 4
          %s317 = sadd.s32 %s313, %s316
          %s318 = smul.addr %s317, 8
          %s319 = scalar_lea.hbm %s1, %s318
          %s320 = sshll.u32 %s309, 4
          %s321 = int_to_ptr.vmem [resolvable:$true] %s320
          %s322 = sshll.u32 %s319, 4
          %s323 = int_to_ptr.hbm [resolvable:$true] %s322
          %328 = dma.vmem_to_hbm [thread:$0]  %s321, 512, %s323, %s306, 128, 128, 8
        $region36: #{tpu_custom_call.1} parent=23 // pred_fallthru
          _
      $region24: #{tpu_custom_call.1} parent=5 // pred_fallthru
        _
      %p329 = scmp.le.s32.totalorder 2, %s13
      // Predicated region
      $region37: #{tpu_custom_call.1} parent=5 // pred_check
        %p330 = pneg %p329
      $region38: #{tpu_custom_call.1} parent=5 // pred_check_branch
        %332 = sbr.rel (%p330) target = $region40
      $region39: #{tpu_custom_call.1} parent=5 // pred_region
        %s333 = ssub.s32 %s13, 2
        // Predicated region
        $region41: #{tpu_custom_call.1} parent=39 // pred_check
          %p334 = pneg %p93
        $region42: #{tpu_custom_call.1} parent=39 // pred_check_branch
          %336 = sbr.rel (%p334) target = $region44
        $region43: #{tpu_custom_call.1} parent=39 // pred_region
          %s337 = sand.u32 %s78, 1
          %s338 = scalar_lea.sflag [#allocation4], %s337
          %s339 = sand.u32 %s78, 1
          %s340 = smul.addr %s339, 32
          %s341 = scalar_lea.vmem [#allocation5], %s340
          %343 = dma.done %s338, 512
        $region44: #{tpu_custom_call.1} parent=39 // pred_fallthru
          _
      $region40: #{tpu_custom_call.1} parent=5 // pred_fallthru
        _
    $region6: #{tpu_custom_call.1} parent=1 // loop_footer
      %s17 = sadd.s32 1, %s13
    $region7: #{tpu_custom_call.1} parent=1 // loop_footer_branch
      %12 = sbr.rel target = $region3
    $region8: #{tpu_custom_call.1} parent=1 // loop_exit
      _
    %344 = vsyncpa [#allocation3], 1
    %s345 = scalar_lea.sflag [#allocation3], 1
    %346 = vsyncpa %s345, 1
    %347 = vsyncpa [#allocation4], 1
    %s348 = scalar_lea.sflag [#allocation4], 1
    %349 = vsyncpa %s348, 1

</llo_original>
